<compile_context>
chip_gen: v7x
topology: tpu7x:2x2x1
jax: 0.10.0
libtpu: 0.0.40
codegen_flags: <defaults>
</compile_context>

<pallas_src>
import jax
import jax.numpy as jnp
from jax.experimental import pallas as pl
from jax.experimental.pallas import tpu as pltpu


def generate_encoder(in_channels, max_len):
    """Sinusoidal table, identical to the PyTorch generate_encoder."""
    pos = jnp.arange(max_len, dtype=jnp.float32)[:, None]            # (L, 1)
    i = jnp.arange(in_channels, dtype=jnp.float32)[None, :]          # (1, C)
    angle_rates = 1.0 / jnp.power(10000.0, 2.0 * jnp.floor(i / 2.0) / in_channels)
    pe = pos * angle_rates                                           # (L, C)
    pe = pe.at[:, 0::2].set(jnp.sin(pe[:, 0::2]))
    pe = pe.at[:, 1::2].set(jnp.cos(pe[:, 1::2]))
    return pe


def _pos_add_kernel(alpha_ref, beta_ref, x_ref, hpe_ref, wpe_ref, o_ref):
    # alpha_ref/beta_ref: (b,) f32 in SMEM (scalar prefetch).
    # x_ref/o_ref: (1, c, t_hw) lane-dense tile of the flattened NC(HW) tensor.
    # hpe_ref/wpe_ref: (c, t_hw) pre-broadcast positional tables (same tile of the hw axis).
    bi = pl.program_id(1)
    a = alpha_ref[bi]
    bt = beta_ref[bi]
    o_ref[...] = (x_ref[...].astype(jnp.float32)
                  + a * hpe_ref[...].astype(jnp.float32)
                  + bt * wpe_ref[...].astype(jnp.float32)).astype(o_ref.dtype)


def _vmem_capacity_bytes():
    """Physical per-core VMEM; conservative fallback if the query is unavailable."""
    try:
        return int(pltpu.get_tpu_info().vmem_capacity_bytes)
    except Exception:
        return 64 << 20  # v7x-sized fallback (smallest of v5e/v6e/v7x)


def _pick_hw_tile(hw, c, x_bytes, tab_bytes, budget_bytes):
    """Largest lane-dense (multiple-of-128) hw tile whose double-buffered footprint
    (2x in + 2x out + 2x hpe + 2x wpe blocks) fits the budget."""
    bytes_per_col = 2 * c * (2 * x_bytes + 2 * tab_bytes)
    max_hw = max(1, budget_bytes // bytes_per_col)
    if hw <= max_hw:
        return hw                                  # single full-extent block (always legal)
    return max(128, (max_hw // 128) * 128)         # multiple of 128 lanes, cdiv grid below


def positional_encoding_2d_paper(x_nchw, alpha, beta, h_enc, w_enc, wh, bh, ww, bw):
    """x_nchw: (b, c, h, w); alpha/beta: (b, 1). Returns (b, c, h, w)."""
    b, c, h, w = x_nchw.shape
    hw = h * w

    # Hoisted batch-invariant linear layers (tiny (L,c)x(c,c) matmuls, done once by XLA).
    hpe = (h_enc[:h, :] @ wh.T + bh).astype(jnp.float32)              # (h, c)
    wpe = (w_enc[:w, :] @ ww.T + bw).astype(jnp.float32)              # (w, c)

    # Pre-broadcast to (c, h*w) so every kernel operand is lane-dense and contiguous.
    tab_dtype = jnp.bfloat16 if x_nchw.dtype == jnp.bfloat16 else jnp.float32
    hpe_b = jnp.broadcast_to(hpe.T[:, :, None], (c, h, w)).reshape(c, hw).astype(tab_dtype)
    wpe_b = jnp.broadcast_to(wpe.T[:, None, :], (c, h, w)).reshape(c, hw).astype(tab_dtype)

    # Zero-cost (contiguous) flatten of the spatial dims.
    x_flat = x_nchw.reshape(b, c, hw)

    # Generation-aware block sizing: ~1/4 of physical VMEM for the double-buffered blocks,
    # scoped VMEM limit raised to ~1/2 of physical (32 MiB on v7x, 64 MiB on v5e/v6e).
    cap = _vmem_capacity_bytes()
    budget_bytes = cap // 4
    vmem_limit = cap // 2

    t_hw = _pick_hw_tile(hw, c, x_nchw.dtype.itemsize,
                         jnp.dtype(tab_dtype).itemsize, budget_bytes)
    n_hw = pl.cdiv(hw, t_hw)
    grid = (n_hw, b)   # batch innermost: table block index constant across the inner loop

    alpha_s = alpha.reshape(b).astype(jnp.float32)
    beta_s = beta.reshape(b).astype(jnp.float32)

    grid_spec = pltpu.PrefetchScalarGridSpec(
        num_scalar_prefetch=2,                                        # alpha, beta -> SMEM
        grid=grid,
        in_specs=[
            pl.BlockSpec((1, c, t_hw), lambda si, bi, *_: (bi, 0, si)),  # x tile
            pl.BlockSpec((c, t_hw),    lambda si, bi, *_: (0, si)),      # hpe tile (resident over b)
            pl.BlockSpec((c, t_hw),    lambda si, bi, *_: (0, si)),      # wpe tile (resident over b)
        ],
        out_specs=pl.BlockSpec((1, c, t_hw), lambda si, bi, *_: (bi, 0, si)),
    )

    # TODO(synk): pass input_output_aliases to alias x -> out when the caller no longer
    # needs x after this call (footprint/scheduling win only; traffic is unchanged).
    out_flat = pl.pallas_call(
        _pos_add_kernel,
        out_shape=jax.ShapeDtypeStruct((b, c, hw), x_nchw.dtype),
        grid_spec=grid_spec,
        compiler_params=pltpu.CompilerParams(
            dimension_semantics=("parallel", "parallel"),
            vmem_limit_bytes=vmem_limit),
    )(alpha_s, beta_s, x_flat, hpe_b, wpe_b)

    return out_flat.reshape(b, c, h, w)


def _reference(x_nchw, alpha, beta, h_enc, w_enc, wh, bh, ww, bw):
    """Pure-JAX reference mirroring the PyTorch forward (eval mode)."""
    b, c, h, w = x_nchw.shape
    hpe = h_enc[:h] @ wh.T + bh                                       # (h, c)
    wpe = w_enc[:w] @ ww.T + bw                                       # (w, c)
    a = alpha.reshape(b, 1, 1, 1)
    bt = beta.reshape(b, 1, 1, 1)
    pos = a * hpe[None, :, None, :] + bt * wpe[None, None, :, :]      # (b, h, w, c)
    pos = jnp.transpose(pos, (0, 3, 1, 2))                            # (b, c, h, w)
    return x_nchw + pos


if __name__ == "__main__":
    # Small shapes consistent with the module: batch=2, channels=8, spatial 16x16.
    B, C, H, W = 2, 8, 16, 16
    MAX_H, MAX_W = 64, 128

    key = jax.random.PRNGKey(0)
    k_x, k_a, k_b, k_wh, k_bh, k_ww, k_bw = jax.random.split(key, 7)

    x = jax.random.normal(k_x, (B, C, H, W), dtype=jnp.float32)
    alpha = jax.random.uniform(k_a, (B, 1), dtype=jnp.float32)
    beta = jax.random.uniform(k_b, (B, 1), dtype=jnp.float32)

    # nn.Linear-like uniform(-1/sqrt(C), 1/sqrt(C)) init.
    bound = 1.0 / jnp.sqrt(jnp.float32(C))
    wh = jax.random.uniform(k_wh, (C, C), minval=-bound, maxval=bound, dtype=jnp.float32)
    bh = jax.random.uniform(k_bh, (C,), minval=-bound, maxval=bound, dtype=jnp.float32)
    ww = jax.random.uniform(k_ww, (C, C), minval=-bound, maxval=bound, dtype=jnp.float32)
    bw = jax.random.uniform(k_bw, (C,), minval=-bound, maxval=bound, dtype=jnp.float32)

    h_enc = generate_encoder(C, MAX_H)
    w_enc = generate_encoder(C, MAX_W)

    out = positional_encoding_2d_paper(x, alpha, beta, h_enc, w_enc, wh, bh, ww, bw)
    out = jax.block_until_ready(out)

    ref = _reference(x, alpha, beta, h_enc, w_enc, wh, bh, ww, bw)
    assert out.shape == (B, C, H, W)
    assert jnp.allclose(out, ref, atol=1e-5, rtol=1e-5), "mismatch vs reference"

    print("KERNEL_OK")
</pallas_src>

<mosaic_0001>
module attributes {stable_mosaic.version = 11 : i64} {
  func.func @_pos_add_kernel(%arg0: i32, %arg1: i32, %arg2: memref<2xf32, #tpu.memory_space<smem>>, %arg3: memref<2xf32, #tpu.memory_space<smem>>, %arg4: memref<1x8x256xf32, #tpu.memory_space<vmem>>, %arg5: memref<8x256xf32, #tpu.memory_space<vmem>>, %arg6: memref<8x256xf32, #tpu.memory_space<vmem>>, %arg7: memref<1x8x256xf32, #tpu.memory_space<vmem>>) attributes {dimension_semantics = [#tpu.dimension_semantics<parallel>, #tpu.dimension_semantics<parallel>], iteration_bounds = array<i64: 1, 2>, scalar_prefetch = 2 : i64, scratch_operands = 0 : i64, tpu.core_type = #tpu.core_type<tc>, window_params = [{transform_indices = @transform_0, window_bounds = array<i64: 1, 8, 256>}, {transform_indices = @transform_1, window_bounds = array<i64: 8, 256>}, {transform_indices = @transform_2, window_bounds = array<i64: 8, 256>}, {transform_indices = @transform_3, window_bounds = array<i64: 1, 8, 256>}]} {
    %0 = arith.index_cast %arg1 : i32 to index
    %1 = memref.load %arg2[%0] : memref<2xf32, #tpu.memory_space<smem>>
    %2 = arith.index_cast %arg1 : i32 to index
    %3 = memref.load %arg3[%2] : memref<2xf32, #tpu.memory_space<smem>>
    %c0 = arith.constant 0 : index
    %c0_0 = arith.constant 0 : index
    %c0_1 = arith.constant 0 : index
    %4 = vector.load %arg4[%c0, %c0_0, %c0_1] : memref<1x8x256xf32, #tpu.memory_space<vmem>>, vector<1x8x256xf32>
    %c0_2 = arith.constant 0 : index
    %c0_3 = arith.constant 0 : index
    %5 = vector.load %arg5[%c0_2, %c0_3] : memref<8x256xf32, #tpu.memory_space<vmem>>, vector<8x256xf32>
    %6 = vector.broadcast %1 : f32 to vector<8x256xf32>
    %7 = arith.mulf %6, %5 : vector<8x256xf32>
    %8 = vector.shape_cast %7 : vector<8x256xf32> to vector<1x8x256xf32>
    %9 = arith.addf %4, %8 : vector<1x8x256xf32>
    %c0_4 = arith.constant 0 : index
    %c0_5 = arith.constant 0 : index
    %10 = vector.load %arg6[%c0_4, %c0_5] : memref<8x256xf32, #tpu.memory_space<vmem>>, vector<8x256xf32>
    %11 = vector.broadcast %3 : f32 to vector<8x256xf32>
    %12 = arith.mulf %11, %10 : vector<8x256xf32>
    %13 = vector.shape_cast %12 : vector<8x256xf32> to vector<1x8x256xf32>
    %14 = arith.addf %9, %13 : vector<1x8x256xf32>
    %c0_6 = arith.constant 0 : index
    %c0_7 = arith.constant 0 : index
    %c0_8 = arith.constant 0 : index
    %15 = vector.load %arg7[%c0_6, %c0_7, %c0_8] : memref<1x8x256xf32, #tpu.memory_space<vmem>>, vector<1x8x256xf32>
    tpu.vector_store %arg7[%c0_6, %c0_7, %c0_8], %14 {strides = array<i32>} : memref<1x8x256xf32, #tpu.memory_space<vmem>>, vector<1x8x256xf32>,
    return
  }
  func.func @transform_0(%arg0: i32, %arg1: i32, %arg2: memref<2xf32, #tpu.memory_space<smem>>, %arg3: memref<2xf32, #tpu.memory_space<smem>>) -> (i32, i32, i32) {
    %c0_i32 = arith.constant 0 : i32
    %c0_i32_0 = arith.constant 0 : i32
    return %arg1, %c0_i32, %arg0 : i32, i32, i32
  }
  func.func @transform_1(%arg0: i32, %arg1: i32, %arg2: memref<2xf32, #tpu.memory_space<smem>>, %arg3: memref<2xf32, #tpu.memory_space<smem>>) -> (i32, i32) {
    %c0_i32 = arith.constant 0 : i32
    %c0_i32_0 = arith.constant 0 : i32
    return %c0_i32, %arg0 : i32, i32
  }
  func.func @transform_2(%arg0: i32, %arg1: i32, %arg2: memref<2xf32, #tpu.memory_space<smem>>, %arg3: memref<2xf32, #tpu.memory_space<smem>>) -> (i32, i32) {
    %c0_i32 = arith.constant 0 : i32
    %c0_i32_0 = arith.constant 0 : i32
    return %c0_i32, %arg0 : i32, i32
  }
  func.func @transform_3(%arg0: i32, %arg1: i32, %arg2: memref<2xf32, #tpu.memory_space<smem>>, %arg3: memref<2xf32, #tpu.memory_space<smem>>) -> (i32, i32, i32) {
    %c0_i32 = arith.constant 0 : i32
    %c0_i32_0 = arith.constant 0 : i32
    return %arg1, %c0_i32, %arg0 : i32, i32, i32
  }
}

</mosaic_0001>

<llo_original>
// kernel: tpu_custom_call.1
$region0: #{tpu_custom_call.1}
  #allocation0 [shape = 'u32[]', space=smem, size = 0x4, offset = 0x4, fixed_abs, tag = 'smem constant byte address 0x4 - core index']
  #allocation1 [shape = 'u32[144,128]{1,0:T(1,128)}', space=vmem, size = 0x12000, scoped, tag = 'internal scratch']
  #allocation2 [shape = 's32[1]{0}', space=sflag, size = 0x4, scoped, tag = 'scoped memory for tpu_custom_call.1']
  #allocation3 [shape = 'u8[512]{0}', space=smem, size = 0x200, scoped, tag = 'prefetched SMEM operand 0']
  #allocation4 [shape = 'u8[512]{0}', space=smem, size = 0x200, scoped, tag = 'prefetched SMEM operand 1']
  %s0 = inlined_call_operand.hbm [shape: f32[2], index: 0, kind: input, shape index: {}]
  %s1 = inlined_call_operand.vmem [shape: f32[2], index: 1, kind: input, shape index: {}]
  %s2 = inlined_call_operand.hbm [shape: f32[2,8,256], index: 2, kind: input, shape index: {}]
  %s3 = inlined_call_operand.hbm [shape: f32[8,256], index: 3, kind: input, shape index: {}]
  %s4 = inlined_call_operand.hbm [shape: f32[8,256], index: 4, kind: input, shape index: {}]
  %s5 = inlined_call_operand.hbm [shape: f32[2,8,256], index: 5, kind: output, shape index: {}]
  %s6 = sld [smem:[#allocation0]]
  $region57: #{tpu_custom_call.1} parent=0
    _
  %s8 = ssub.s32 1, %s6
  %s9 = scalar_select 0, %s8, %s6
  %11 = dma.hbm_to_smem %s0, 16, [#allocation3], [#allocation2]
  %s12 = sshll.u32 %s1, 4
  %s13 = int_to_ptr.vmem [resolvable:$true] %s12
  %15 = dma.vmem_to_smem %s13, 16, [#allocation4], [#allocation2]
  %16 = dma.done [#allocation2], 32
  %17 = sfence
  $region1: #{tpu_custom_call.1} parent=0
    #allocation5 [shape = 'u8[16384]{0}', space=vmem, size = 0x4000, scoped, tag = 'input window, operand 2']
    #allocation6 [shape = 's32[2]{0}', space=sflag, size = 0x8, scoped, tag = 'scoped memory for tpu_custom_call.1']
    #allocation7 [shape = 's32[2]{0}', space=sflag, size = 0x8, scoped, tag = 'scoped memory for tpu_custom_call.1']
    #allocation8 [shape = 'u8[8192]{0}', space=vmem, size = 0x2000, scoped, tag = 'input window, operand 3, single buffered']
    #allocation9 [shape = 's32[1]{0}', space=sflag, size = 0x4, scoped, tag = 'scoped memory for tpu_custom_call.1']
    #allocation10 [shape = 'u8[8192]{0}', space=vmem, size = 0x2000, scoped, tag = 'input window, operand 4, single buffered']
    #allocation11 [shape = 'u8[16384]{0}', space=vmem, size = 0x4000, scoped, tag = 'output window, operand 0']
    %18 = vsyncpa [#allocation6], 0
    %s19 = scalar_lea.sflag [#allocation6], 1
    %20 = vsyncpa %s19, 0
    %21 = vsyncpa [#allocation9], 0
    %22 = vsyncpa [#allocation7], 0
    %s23 = scalar_lea.sflag [#allocation7], 1
    %24 = vsyncpa %s23, 0
    loop: start=0, step=1, limit=4
    $region2: #{tpu_custom_call.1} parent=1 // loop_pre_header
      _
    $region3: #{tpu_custom_call.1} parent=1 // loop_header
      %s26 = sphi 0, %s30
      %p27 = scmp.ge.s32.totalorder %s26, 4
      %s33 = sphi 0, %s45
      %s34 = sphi 0, %s41
      %s35 = sphi 0, %s33
      %s36 = sphi 0, %s34
      %s37 = sphi 0, %s35
      %s38 = sphi 0, %s36
      %s50 = sphi 0, %s52
      %s53 = sphi 0, %s50
      %s54 = sphi 0, %s53
      %s70 = sphi 0, %s54
      %s76 = sphi 0, %s78
      %s79 = sphi 0, %s76
      %s80 = sphi 0, %s79
      %s96 = sphi 0, %s80
      %s102 = sphi 0, %s104
      %s105 = sphi 0, %s102
      %s106 = sphi 0, %s105
      %s122 = sphi 0, %s106
      %s130 = sphi 0, %s132
      %s133 = sphi 0, %s130
      %s134 = sphi 0, %s133
      %s150 = sphi 0, %s134
    $region4: #{tpu_custom_call.1} parent=1 // loop_header_branch
      %29 = sbr.rel (%p27) target = $region8
    $region5: #{tpu_custom_call.1} parent=1 // loop_body
      %s31 = ssub.s32 %s26, 1
      %s32 = ssub.s32 %s26, 2
      %s39 = sadd.s32 1, %s34
      %p40 = scmp.ge.s32.totalorder %s39, 2
      %s41 = scalar_select %p40, 0, %s39
      %s42 = sadd.s32 1, %s33
      %s43 = scalar_select %p40, %s42, %s33
      %p44 = scmp.ge.s32.totalorder %s43, 1
      %s45 = scalar_select %p44, 0, %s43
      %s46 = ssub.s32 %s34, %s41
      %s47 = ssub.s32 %s33, %s45
      %s48 = sor.u32 %s46, %s47
      %p49 = scmp.eq.s32.totalorder %s48, 0
      %s51 = sadd.s32 %s50, 1
      %s52 = scalar_select %p49, %s50, %s51
      %p55 = pneg %p49
      %p56 = scmp.eq.s32.totalorder %s26, 1
      %p57 = por %p55, %p56
      %p58 = scmp.ne.s32.totalorder %s50, %s53
      %p59 = scmp.eq.s32.totalorder %s26, 0
      %p60 = por %p58, %p59
      %p61 = scmp.ne.s32.totalorder %s50, %s53
      %p62 = scmp.eq.s32.totalorder %s31, 1
      %p63 = por %p61, %p62
      %p64 = scmp.ne.s32.totalorder %s53, %s54
      %p65 = scmp.eq.s32.totalorder %s31, 0
      %p66 = por %p64, %p65
      %p67 = scmp.ne.s32.totalorder %s53, %s54
      %p68 = scmp.eq.s32.totalorder %s32, 1
      %p69 = por %p67, %p68
      %p71 = scmp.ne.s32.totalorder %s54, %s70
      %p72 = scmp.eq.s32.totalorder %s32, 0
      %p73 = por %p71, %p72
      %s74 = ssub.s32 %s33, %s45
      %p75 = scmp.eq.s32.totalorder %s74, 0
      %s77 = sadd.s32 %s76, 1
      %s78 = scalar_select %p75, %s76, %s77
      %p81 = pneg %p75
      %p82 = scmp.eq.s32.totalorder %s26, 1
      %p83 = por %p81, %p82
      %p84 = scmp.ne.s32.totalorder %s76, %s79
      %p85 = scmp.eq.s32.totalorder %s26, 0
      %p86 = por %p84, %p85
      %p87 = scmp.ne.s32.totalorder %s76, %s79
      %p88 = scmp.eq.s32.totalorder %s31, 1
      %p89 = por %p87, %p88
      %p90 = scmp.ne.s32.totalorder %s79, %s80
      %p91 = scmp.eq.s32.totalorder %s31, 0
      %p92 = por %p90, %p91
      %p93 = scmp.ne.s32.totalorder %s79, %s80
      %p94 = scmp.eq.s32.totalorder %s32, 1
      %p95 = por %p93, %p94
      %p97 = scmp.ne.s32.totalorder %s80, %s96
      %p98 = scmp.eq.s32.totalorder %s32, 0
      %p99 = por %p97, %p98
      %s100 = ssub.s32 %s33, %s45
      %p101 = scmp.eq.s32.totalorder %s100, 0
      %s103 = sadd.s32 %s102, 1
      %s104 = scalar_select %p101, %s102, %s103
      %p107 = pneg %p101
      %p108 = scmp.eq.s32.totalorder %s26, 1
      %p109 = por %p107, %p108
      %p110 = scmp.ne.s32.totalorder %s102, %s105
      %p111 = scmp.eq.s32.totalorder %s26, 0
      %p112 = por %p110, %p111
      %p113 = scmp.ne.s32.totalorder %s102, %s105
      %p114 = scmp.eq.s32.totalorder %s31, 1
      %p115 = por %p113, %p114
      %p116 = scmp.ne.s32.totalorder %s105, %s106
      %p117 = scmp.eq.s32.totalorder %s31, 0
      %p118 = por %p116, %p117
      %p119 = scmp.ne.s32.totalorder %s105, %s106
      %p120 = scmp.eq.s32.totalorder %s32, 1
      %p121 = por %p119, %p120
      %p123 = scmp.ne.s32.totalorder %s106, %s122
      %p124 = scmp.eq.s32.totalorder %s32, 0
      %p125 = por %p123, %p124
      %s126 = ssub.s32 %s34, %s41
      %s127 = ssub.s32 %s33, %s45
      %s128 = sor.u32 %s126, %s127
      %p129 = scmp.eq.s32.totalorder %s128, 0
      %s131 = sadd.s32 %s130, 1
      %s132 = scalar_select %p129, %s130, %s131
      %p135 = pneg %p129
      %p136 = scmp.eq.s32.totalorder %s26, 1
      %p137 = por %p135, %p136
      %p138 = scmp.ne.s32.totalorder %s130, %s133
      %p139 = scmp.eq.s32.totalorder %s26, 0
      %p140 = por %p138, %p139
      %p141 = scmp.ne.s32.totalorder %s130, %s133
      %p142 = scmp.eq.s32.totalorder %s31, 1
      %p143 = por %p141, %p142
      %p144 = scmp.ne.s32.totalorder %s133, %s134
      %p145 = scmp.eq.s32.totalorder %s31, 0
      %p146 = por %p144, %p145
      %p147 = scmp.ne.s32.totalorder %s133, %s134
      %p148 = scmp.eq.s32.totalorder %s32, 1
      %p149 = por %p147, %p148
      %p151 = scmp.ne.s32.totalorder %s134, %s150
      %p152 = scmp.eq.s32.totalorder %s32, 0
      %p153 = por %p151, %p152
      %p154 = scmp.le.s32.totalorder 1, %s26
      %p155 = scmp.lt.s32.totalorder %s26, 3
      %p156 = pnand %p154, %p155
      %p157 = pneg %p156
      // Predicated region
      $region9: #{tpu_custom_call.1} parent=5 // pred_check
        _
      $region10: #{tpu_custom_call.1} parent=5 // pred_check_branch
        %159 = sbr.rel (%p156) target = $region12
      $region11: #{tpu_custom_call.1} parent=5 // pred_region
        %s160 = ssub.s32 %s26, 1
        // Predicated region
        $region13: #{tpu_custom_call.1} parent=11 // pred_check
          %p161 = pneg %p92
        $region14: #{tpu_custom_call.1} parent=11 // pred_check_branch
          %163 = sbr.rel (%p161) target = $region16
        $region15: #{tpu_custom_call.1} parent=11 // pred_region
          %s164 = smul.u32 2, %s35
          %s166 = ssub.s32 256, 256
          %167 = vsyncadd [#allocation9], %s166
          %s168 = smul.addr %s164, 128
          %s169 = scalar_lea.hbm %s3, %s168
          %s171 = sshll.u32 [#allocation8], 4
          %s172 = int_to_ptr.vmem [resolvable:$true] %s171
          %174 = dma.hbm_to_vmem [thread:$0]  %s169, 256, %s172, [#allocation9]
        $region16: #{tpu_custom_call.1} parent=11 // pred_fallthru
          _
        // Predicated region
        $region17: #{tpu_custom_call.1} parent=11 // pred_check
          %p175 = pneg %p118
        $region18: #{tpu_custom_call.1} parent=11 // pred_check_branch
          %177 = sbr.rel (%p175) target = $region20
        $region19: #{tpu_custom_call.1} parent=11 // pred_region
          %s178 = smul.u32 2, %s35
          %s180 = ssub.s32 256, 256
          %181 = vsyncadd [#allocation9], %s180
          %s182 = smul.addr %s178, 128
          %s183 = scalar_lea.hbm %s4, %s182
          %s185 = sshll.u32 [#allocation10], 4
          %s186 = int_to_ptr.vmem [resolvable:$true] %s185
          %188 = dma.hbm_to_vmem [thread:$0]  %s183, 256, %s186, [#allocation9]
        $region20: #{tpu_custom_call.1} parent=11 // pred_fallthru
          _
      $region12: #{tpu_custom_call.1} parent=5 // pred_fallthru
        _
      %p189 = scmp.lt.s32.totalorder %s26, 2
      // Predicated region
      $region21: #{tpu_custom_call.1} parent=5 // pred_check
        %p190 = pneg %p189
      $region22: #{tpu_custom_call.1} parent=5 // pred_check_branch
        %192 = sbr.rel (%p190) target = $region24
      $region23: #{tpu_custom_call.1} parent=5 // pred_region
        // Predicated region
        $region25: #{tpu_custom_call.1} parent=23 // pred_check
          %p193 = pneg %p60
        $region26: #{tpu_custom_call.1} parent=23 // pred_check_branch
          %195 = sbr.rel (%p193) target = $region28
        $region27: #{tpu_custom_call.1} parent=23 // pred_region
          %s196 = sand.u32 %s50, 1
          %s197 = scalar_lea.sflag [#allocation6], %s196
          %s198 = sand.u32 %s50, 1
          %s199 = smul.addr %s198, 16
          %s200 = scalar_lea.vmem [#allocation5], %s199
          %s201 = smul.u32 2, %s33
          %s203 = ssub.s32 256, 256
          %204 = vsyncadd %s197, %s203
          %s205 = smul.addr %s34, 2
          %s206 = sadd.s32 %s201, %s205
          %s207 = smul.addr %s206, 128
          %s208 = scalar_lea.hbm %s2, %s207
          %s210 = sshll.u32 %s200, 4
          %s211 = int_to_ptr.vmem [resolvable:$true] %s210
          %213 = dma.hbm_to_vmem [thread:$0]  %s208, 256, %s211, %s197
        $region28: #{tpu_custom_call.1} parent=23 // pred_fallthru
          _
      $region24: #{tpu_custom_call.1} parent=5 // pred_fallthru
        _
      %p214 = scmp.le.s32.totalorder 1, %s26
      %p215 = scmp.lt.s32.totalorder %s26, 3
      %p216 = pnand %p214, %p215
      %p217 = pneg %p216
      // Predicated region
      $region29: #{tpu_custom_call.1} parent=5 // pred_check
        _
      $region30: #{tpu_custom_call.1} parent=5 // pred_check_branch
        %219 = sbr.rel (%p216) target = $region32
      $region31: #{tpu_custom_call.1} parent=5 // pred_region
        %s220 = ssub.s32 %s26, 1
        %s221 = sand.u32 %s53, 1
        %s222 = scalar_lea.sflag [#allocation6], %s221
        %s223 = sand.u32 %s53, 1
        %s224 = smul.addr %s223, 16
        %s225 = scalar_lea.vmem [#allocation5], %s224
        // Predicated region
        $region33: #{tpu_custom_call.1} parent=31 // pred_check
          %p226 = pneg %p66
        $region34: #{tpu_custom_call.1} parent=31 // pred_check_branch
          %228 = sbr.rel (%p226) target = $region36
        $region35: #{tpu_custom_call.1} parent=31 // pred_region
          %229 = dma.done %s222, 256
        $region36: #{tpu_custom_call.1} parent=31 // pred_fallthru
          _
        // Predicated region
        $region37: #{tpu_custom_call.1} parent=31 // pred_check
          %p230 = pneg %p92
        $region38: #{tpu_custom_call.1} parent=31 // pred_check_branch
          %232 = sbr.rel (%p230) target = $region40
        $region39: #{tpu_custom_call.1} parent=31 // pred_region
          %233 = dma.done [#allocation9], 256
        $region40: #{tpu_custom_call.1} parent=31 // pred_fallthru
          _
        // Predicated region
        $region41: #{tpu_custom_call.1} parent=31 // pred_check
          %p234 = pneg %p118
        $region42: #{tpu_custom_call.1} parent=31 // pred_check_branch
          %236 = sbr.rel (%p234) target = $region44
        $region43: #{tpu_custom_call.1} parent=31 // pred_region
          %237 = dma.done [#allocation9], 256
        $region44: #{tpu_custom_call.1} parent=31 // pred_fallthru
          _
        %s238 = sand.u32 %s53, 1
        %s239 = scalar_lea.sflag [#allocation6], %s238
        %s240 = sand.u32 %s53, 1
        %s241 = smul.addr %s240, 16
        %s242 = scalar_lea.vmem [#allocation5], %s241
        %p243 = pneg %p66
        %p244 = pneg %p63
        %p245 = pneg %p92
        %p246 = pneg %p89
        %p247 = pneg %p118
        %p248 = pneg %p115
        %p249 = pneg %p146
        %p250 = pneg %p143
        %s251 = sand.u32 %s133, 1
        %s252 = scalar_lea.sflag [#allocation7], %s251
        %s253 = sand.u32 %s133, 1
        %s254 = smul.addr %s253, 16
        %s255 = scalar_lea.vmem [#allocation11], %s254
        %s256 = smul.u32 2, %s35
        %s257 = smul.u32 2, %s35
        %s258 = smul.u32 2, %s35
        %s259 = smul.u32 2, %s35
        %s260 = sld [smem:[#allocation3 + %s36]]
        %s261 = sld [smem:[#allocation4 + %s36]]
        %v262 = vld [vmem:[%s225] sm:$0xff]
        %v263 = vld [vmem:[%s225 + $0x8] sm:$0xff]
        %v264 = vld [vmem:[#allocation8] sm:$0xff]
        %v265 = vld [vmem:[#allocation8 + $0x8] sm:$0xff]
        %v266 = vstv %s260
        %v267 = vmul.f32 %v266, %v264
        %v268 = vmul.f32 %v266, %v265
        %v269 = vadd.f32 %v262, %v267
        %v270 = vadd.f32 %v263, %v268
        %v271 = vld [vmem:[#allocation10] sm:$0xff]
        %v272 = vld [vmem:[#allocation10 + $0x8] sm:$0xff]
        %v273 = vstv %s261
        %v274 = vmul.f32 %v273, %v271
        %v275 = vmul.f32 %v273, %v272
        %v276 = vadd.f32 %v269, %v274
        %v277 = vadd.f32 %v270, %v275
        %278 = vst [vmem:[%s255] sm:$0xff] %v276
        %279 = vst [vmem:[%s255 + $0x8] sm:$0xff] %v277
        %s280 = sand.u32 %s133, 1
        %s281 = scalar_lea.sflag [#allocation7], %s280
        %s282 = sand.u32 %s133, 1
        %s283 = smul.addr %s282, 16
        %s284 = scalar_lea.vmem [#allocation11], %s283
        // Predicated region
        $region45: #{tpu_custom_call.1} parent=31 // pred_check
          %p285 = pneg %p143
        $region46: #{tpu_custom_call.1} parent=31 // pred_check_branch
          %287 = sbr.rel (%p285) target = $region48
        $region47: #{tpu_custom_call.1} parent=31 // pred_region
          %s288 = smul.u32 2, %s35
          %s290 = ssub.s32 256, 256
          %291 = vsyncadd %s281, %s290
          %s292 = smul.addr %s36, 2
          %s293 = sadd.s32 %s288, %s292
          %s294 = smul.addr %s293, 128
          %s295 = scalar_lea.hbm %s5, %s294
          %s297 = sshll.u32 %s284, 4
          %s298 = int_to_ptr.vmem [resolvable:$true] %s297
          %300 = dma.vmem_to_hbm [thread:$0]  %s298, 256, %s295, %s281
        $region48: #{tpu_custom_call.1} parent=31 // pred_fallthru
          _
      $region32: #{tpu_custom_call.1} parent=5 // pred_fallthru
        _
      %p301 = scmp.le.s32.totalorder 2, %s26
      // Predicated region
      $region49: #{tpu_custom_call.1} parent=5 // pred_check
        %p302 = pneg %p301
      $region50: #{tpu_custom_call.1} parent=5 // pred_check_branch
        %304 = sbr.rel (%p302) target = $region52
      $region51: #{tpu_custom_call.1} parent=5 // pred_region
        %s305 = ssub.s32 %s26, 2
        // Predicated region
        $region53: #{tpu_custom_call.1} parent=51 // pred_check
          %p306 = pneg %p149
        $region54: #{tpu_custom_call.1} parent=51 // pred_check_branch
          %308 = sbr.rel (%p306) target = $region56
        $region55: #{tpu_custom_call.1} parent=51 // pred_region
          %s309 = sand.u32 %s134, 1
          %s310 = scalar_lea.sflag [#allocation7], %s309
          %s311 = sand.u32 %s134, 1
          %s312 = smul.addr %s311, 16
          %s313 = scalar_lea.vmem [#allocation11], %s312
          %314 = dma.done %s310, 256
        $region56: #{tpu_custom_call.1} parent=51 // pred_fallthru
          _
      $region52: #{tpu_custom_call.1} parent=5 // pred_fallthru
        _
    $region6: #{tpu_custom_call.1} parent=1 // loop_footer
      %s30 = sadd.s32 1, %s26
    $region7: #{tpu_custom_call.1} parent=1 // loop_footer_branch
      %25 = sbr.rel target = $region3
    $region8: #{tpu_custom_call.1} parent=1 // loop_exit
      _
    %315 = vsyncpa [#allocation6], 1
    %s316 = scalar_lea.sflag [#allocation6], 1
    %317 = vsyncpa %s316, 1
    %318 = vsyncpa [#allocation9], 1
    %319 = vsyncpa [#allocation7], 1
    %s320 = scalar_lea.sflag [#allocation7], 1
    %321 = vsyncpa %s320, 1

</llo_original>
